<compile_context>
chip_gen: v7x
topology: tpu7x:2x2x1
jax: 0.10.0
libtpu: 0.0.40
codegen_flags: <defaults>
</compile_context>

<pallas_src>
from functools import partial

import jax
import jax.numpy as jnp
from jax.experimental import pallas as pl
from jax.experimental.pallas import tpu as pltpu


def _rmsnorm_kernel(eps, inv_h, x_ref, o_ref):
    x = x_ref[...]                                    # (ROW_TILE, H), input dtype
    xf = x.astype(jnp.float32)
    ssq = jnp.sum(xf * xf, axis=-1, keepdims=True)    # (ROW_TILE, 1) f32
    inv = jax.lax.rsqrt(ssq * inv_h + eps)            # EUP rsqrt; 1/H folded in
    o_ref[...] = (xf * inv).astype(o_ref.dtype)


def _sublane_multiple(dtype):
    # Sublane packing of a vreg: 8 rows for 4-byte, 16 for 2-byte, 32 for 1-byte.
    itemsize = jnp.dtype(dtype).itemsize
    return {4: 8, 2: 16, 1: 32}.get(itemsize, 8)


def _vmem_capacity_bytes():
    try:
        return int(pltpu.get_tpu_info().vmem_capacity_bytes)
    except Exception:
        return 64 * 1024 * 1024  # conservative (v7x-sized) fallback


def llmc_rmsnorm(x, weight=None, eps=1e-6, row_tile=None):
    """Pallas implementation of LlmcRMSNorm.forward.

    `weight` is accepted for API parity but (exactly like the PyTorch module)
    is NOT used in the forward computation.
    """
    del weight  # unused in LlmcRMSNorm.forward (weight is ones and not applied)
    orig_shape = x.shape
    hidden = orig_shape[-1]
    x2d = x.reshape(-1, hidden)
    rows = x2d.shape[0]

    itemsize = jnp.dtype(x.dtype).itemsize
    sublane = _sublane_multiple(x.dtype)

    # --- per-row VMEM footprint ----------------------------------------------
    # Double-buffered input + output (2 bufs each, itemsize bytes/elem) plus
    # ~one streaming f32 working set (the (row_tile,1) ssq accumulator is noise).
    bytes_per_row = hidden * (4 * itemsize + 4)

    # --- generation-aware tile budget -----------------------------------------
    vmem_cap = _vmem_capacity_bytes()
    if vmem_cap >= 96 * 1024 * 1024:
        # v5e / v6e: 128 MiB physical VMEM per TC.
        budget = 56 * 1024 * 1024
        vmem_limit_cap = 64 * 1024 * 1024
    else:
        # v7x: 64 MiB per TC; leave headroom for compiler internal scratch.
        budget = 28 * 1024 * 1024
        vmem_limit_cap = 48 * 1024 * 1024

    rows_rounded = max(sublane, ((rows + sublane - 1) // sublane) * sublane)

    if row_tile is None:
        row_tile = max(sublane, budget // max(bytes_per_row, 1))
        row_tile = max(sublane, (row_tile // sublane) * sublane)
    row_tile = min(row_tile, rows_rounded)
    row_tile = max(sublane, (row_tile // sublane) * sublane)

    # --- megacore guard (v7x: 2 TCs share HBM) --------------------------------
    # Guarantee >= 2 tiles on the "parallel" row axis whenever rows allow it;
    # the extra ~0.35us step is negligible on 1-TC chips.
    if pl.cdiv(rows, row_tile) < 2 and row_tile >= 2 * sublane:
        half = (((row_tile // 2) + sublane - 1) // sublane) * sublane
        row_tile = max(sublane, half)

    n_tiles = pl.cdiv(rows, row_tile)

    # --- VMEM limit sized to the tile ------------------------------------------
    tile_bytes = row_tile * bytes_per_row
    vmem_limit = int(min(vmem_limit_cap,
                         max(tile_bytes + tile_bytes // 4, 16 * 1024 * 1024)))

    kernel = partial(_rmsnorm_kernel, float(eps), 1.0 / float(hidden))

    # Ragged rows: grid covers cdiv(rows, row_tile); Pallas handles the partial
    # last block (per-row math, OOB rows never written back) -- no pad/slice,
    # no extra full-tensor HBM traffic.
    out = pl.pallas_call(
        kernel,
        out_shape=jax.ShapeDtypeStruct((rows, hidden), x.dtype),
        grid_spec=pltpu.PrefetchScalarGridSpec(
            num_scalar_prefetch=0,
            grid=(n_tiles,),
            in_specs=[pl.BlockSpec((row_tile, hidden), lambda i: (i, 0))],
            out_specs=pl.BlockSpec((row_tile, hidden), lambda i: (i, 0)),
        ),
        compiler_params=pltpu.CompilerParams(
            dimension_semantics=("parallel",),
            vmem_limit_bytes=vmem_limit,
        ),
    )(x2d)

    # TODO(synk): for hidden >= 16K on v7x, chunk the hidden axis inside the
    # kernel (two-pass fori_loop over pl.ds chunks) to bound the f32 transient
    # and allow larger row tiles; not needed for typical model hidden sizes.
    return out.reshape(orig_shape)


def llmc_rmsnorm_ref(x, eps=1e-6):
    xf = x.astype(jnp.float32)
    var = jnp.mean(xf * xf, axis=-1, keepdims=True)
    return (xf * jax.lax.rsqrt(var + eps)).astype(x.dtype)


if __name__ == "__main__":
    key = jax.random.PRNGKey(0)
    eps = 1e-6

    # Case 1: bf16, lane-aligned hidden (small but representative layout).
    batch, seq, hidden = 2, 8, 128
    x = jax.random.normal(key, (batch, seq, hidden), dtype=jnp.float32).astype(
        jnp.bfloat16)
    # Deterministic parameter init: LlmcRMSNorm.__init__ sets weight = ones_like(weight).
    weight = jnp.ones((hidden,), dtype=jnp.bfloat16)  # unused in forward (by design)

    out = llmc_rmsnorm(x, weight, eps)
    jax.block_until_ready(out)
    ref = llmc_rmsnorm_ref(x, eps)
    assert out.shape == x.shape and out.dtype == x.dtype
    assert jnp.allclose(out.astype(jnp.float32), ref.astype(jnp.float32),
                        atol=1e-2, rtol=1e-2)

    # Case 2: f32 with a ragged row count (exercises the partial-block path:
    # rows=15 -> 2 tiles of 8 rows, last tile partially valid).
    key2 = jax.random.PRNGKey(1)
    x2 = jax.random.normal(key2, (3, 5, 256), dtype=jnp.float32)
    out2 = llmc_rmsnorm(x2, None, eps)
    jax.block_until_ready(out2)
    ref2 = llmc_rmsnorm_ref(x2, eps)
    assert out2.shape == x2.shape and out2.dtype == x2.dtype
    assert jnp.allclose(out2, ref2, atol=1e-5, rtol=1e-5)

    print("KERNEL_OK")
</pallas_src>

<mosaic_0001>
module attributes {stable_mosaic.version = 11 : i64} {
  func.func @_rmsnorm_kernel(%arg0: i32, %arg1: memref<16x128xbf16, #tpu.memory_space<vmem>>, %arg2: memref<16x128xbf16, #tpu.memory_space<vmem>>) attributes {dimension_semantics = [#tpu.dimension_semantics<parallel>], iteration_bounds = array<i64: 1>, scalar_prefetch = 0 : i64, scratch_operands = 0 : i64, tpu.core_type = #tpu.core_type<tc>, window_params = [{transform_indices = @transform_0, window_bounds = array<i64: 16, 128>}, {transform_indices = @transform_1, window_bounds = array<i64: 16, 128>}]} {
    %c0 = arith.constant 0 : index
    %c0_0 = arith.constant 0 : index
    %0 = vector.load %arg1[%c0, %c0_0] : memref<16x128xbf16, #tpu.memory_space<vmem>>, vector<16x128xbf16>
    %1 = arith.extf %0 : vector<16x128xbf16> to vector<16x128xf32>
    %2 = arith.mulf %1, %1 : vector<16x128xf32>
    %cst = arith.constant dense<0.000000e+00> : vector<16xf32>
    %3 = vector.multi_reduction <add>, %2, %cst [1] : vector<16x128xf32> to vector<16xf32>
    %4 = vector.shape_cast %3 : vector<16xf32> to vector<16x1xf32>
    %cst_1 = arith.constant 7.812500e-03 : f32
    %5 = vector.broadcast %cst_1 : f32 to vector<16x1xf32>
    %6 = arith.mulf %4, %5 : vector<16x1xf32>
    %cst_2 = arith.constant 9.99999997E-7 : f32
    %7 = vector.broadcast %cst_2 : f32 to vector<16x1xf32>
    %8 = arith.addf %6, %7 : vector<16x1xf32>
    %9 = math.rsqrt %8 : vector<16x1xf32>
    %10 = vector.broadcast %9 : vector<16x1xf32> to vector<16x128xf32>
    %11 = arith.mulf %1, %10 : vector<16x128xf32>
    %12 = arith.truncf %11 : vector<16x128xf32> to vector<16x128xbf16>
    %c0_3 = arith.constant 0 : index
    %c0_4 = arith.constant 0 : index
    %13 = vector.load %arg2[%c0_3, %c0_4] : memref<16x128xbf16, #tpu.memory_space<vmem>>, vector<16x128xbf16>
    tpu.vector_store %arg2[%c0_3, %c0_4], %12 {strides = array<i32>} : memref<16x128xbf16, #tpu.memory_space<vmem>>, vector<16x128xbf16>,
    return
  }
  func.func @transform_0(%arg0: i32) -> (i32, i32) {
    %c0_i32 = arith.constant 0 : i32
    %c0_i32_0 = arith.constant 0 : i32
    return %arg0, %c0_i32 : i32, i32
  }
  func.func @transform_1(%arg0: i32) -> (i32, i32) {
    %c0_i32 = arith.constant 0 : i32
    %c0_i32_0 = arith.constant 0 : i32
    return %arg0, %c0_i32 : i32, i32
  }
}

</mosaic_0001>

<llo_original>
// kernel: tpu_custom_call.1
$region0: #{tpu_custom_call.1}
  #allocation0 [shape = 'u32[]', space=smem, size = 0x4, offset = 0x4, fixed_abs, tag = 'smem constant byte address 0x4 - core index']
  #allocation1 [shape = 'u32[144,128]{1,0:T(1,128)}', space=vmem, size = 0x12000, scoped, tag = 'internal scratch']
  %s0 = inlined_call_operand.hbm [shape: bf16[16,128], index: 0, kind: input, shape index: {}]
  %s1 = inlined_call_operand.hbm [shape: bf16[16,128], index: 1, kind: output, shape index: {}]
  %s2 = sld [smem:[#allocation0]]
  $region18: #{tpu_custom_call.1} parent=0
    _
  %s4 = ssub.s32 1, %s2
  %s5 = scalar_select 0, %s4, %s2
  $region1: #{tpu_custom_call.1} parent=0
    #allocation2 [shape = 'u8[4096]{0}', space=vmem, size = 0x1000, scoped, tag = 'input window, operand 0, single buffered']
    #allocation3 [shape = 's32[1]{0}', space=sflag, size = 0x4, scoped, tag = 'scoped memory for tpu_custom_call.1']
    #allocation4 [shape = 's32[1]{0}', space=sflag, size = 0x4, scoped, tag = 'scoped memory for tpu_custom_call.1']
    #allocation5 [shape = 'u8[4096]{0}', space=vmem, size = 0x1000, scoped, tag = 'output window, operand 0, single buffered']
    %6 = vsyncpa [#allocation3], 0
    %7 = vsyncpa [#allocation4], 0
    // Predicated region
    $region2: #{tpu_custom_call.1} parent=1 // pred_check
      _
    $region3: #{tpu_custom_call.1} parent=1 // pred_check_branch
      %9 = sbr.rel (0) target = $region5
    $region4: #{tpu_custom_call.1} parent=1 // pred_region
      %s11 = ssub.s32 128, 128
      %12 = vsyncadd [#allocation3], %s11
      %s13 = sshll.u32 [#allocation2], 4
      %s14 = int_to_ptr.vmem [resolvable:$true] %s13
      %19 = dma.hbm_to_vmem [thread:$0]  %s0, 128, %s14, [#allocation3], 64, 64, 4
    $region5: #{tpu_custom_call.1} parent=1 // pred_fallthru
      _
    // Predicated region
    $region6: #{tpu_custom_call.1} parent=1 // pred_check
      _
    $region7: #{tpu_custom_call.1} parent=1 // pred_check_branch
      %21 = sbr.rel (0) target = $region9
    $region8: #{tpu_custom_call.1} parent=1 // pred_region
      %22 = dma.done [#allocation3], 128
    $region9: #{tpu_custom_call.1} parent=1 // pred_fallthru
      _
    %v23 = vld [vmem:[#allocation2] sm:$0xf]
    %v24 = vld [vmem:[#allocation2 + $0x4] sm:$0xf]
    %v25 = vunpack.c.l.bf16 %v23
    %v26 = vunpack.c.l.bf16 %v24
    %v27 = vmul.f32 %v25, %v25
    %v28 = vmul.f32 %v26, %v26
    %29 = vadd.xlane.f32.xlu0 %v27
    %v30 = vpop.xlane.xlu0 %29
    %31 = vadd.xlane.f32.xlu0 %v28
    %v32 = vpop.xlane.xlu0 %31
    %v33 = vmul.f32 %v30, 0.0078125
    %v34 = vmul.f32 %v32, 0.0078125
    %v35 = vadd.f32 %v33, 1e-06
    %v36 = vadd.f32 %v34, 1e-06
    %v37 = vrsqrt.pop %v35
    %v38 = vrsqrt.pop %v36
    %v39 = vmul.f32 %v25, %v37
    %v40 = vmul.f32 %v26, %v38
    %v41 = vpack.c.bf16 %v40, %v39
    %v43 = vunpack.c.l.b16 %v41
    %v44 = vunpack.c.h.b16 %v41
    %v45 = vpack.c.b16 %v43, %v43
    %v46 = vpack.c.b16 %v44, %v44
    %49 = vst [vmem:[#allocation5] sm:$0xf] %v45
    %50 = vst [vmem:[#allocation5 + $0x4] sm:$0xf] %v46
    // Predicated region
    $region10: #{tpu_custom_call.1} parent=1 // pred_check
      _
    $region11: #{tpu_custom_call.1} parent=1 // pred_check_branch
      %52 = sbr.rel (0) target = $region13
    $region12: #{tpu_custom_call.1} parent=1 // pred_region
      %s54 = ssub.s32 128, 128
      %55 = vsyncadd [#allocation4], %s54
      %s56 = sshll.u32 [#allocation5], 4
      %s57 = int_to_ptr.vmem [resolvable:$true] %s56
      %62 = dma.vmem_to_hbm [thread:$0]  %s57, 128, %s1, [#allocation4], 64, 64, 4
    $region13: #{tpu_custom_call.1} parent=1 // pred_fallthru
      _
    // Predicated region
    $region14: #{tpu_custom_call.1} parent=1 // pred_check
      _
    $region15: #{tpu_custom_call.1} parent=1 // pred_check_branch
      %64 = sbr.rel (0) target = $region17
    $region16: #{tpu_custom_call.1} parent=1 // pred_region
      %65 = dma.done [#allocation4], 128
    $region17: #{tpu_custom_call.1} parent=1 // pred_fallthru
      _
    %66 = vsyncpa [#allocation3], 1
    %67 = vsyncpa [#allocation4], 1

</llo_original>
